<compile_context>
chip_gen: v7x
topology: tpu7x:2x2x1
jax: 0.10.0
libtpu: 0.0.40
codegen_flags: <defaults>
</compile_context>

<pallas_src>
import jax
import jax.numpy as jnp
from jax.experimental import pallas as pl
from jax.experimental.pallas import tpu as pltpu


# ----------------------------------------------------------------------------
# helpers
# ----------------------------------------------------------------------------
def _round_up(x, m):
    return ((x + m - 1) // m) * m


def _physical_vmem_bytes():
    try:
        info = pltpu.get_tpu_info()
        cap = getattr(info, "vmem_capacity_bytes", None)
        if cap:
            return int(cap)
    except Exception:
        pass
    return 64 * 1024 * 1024  # conservative: correct for v7x, safe everywhere


def _vmem_estimate(tile_rows, tile_ff, d_model_p, num_k, out_bytes):
    """Rough VMEM footprint of one pipelined grid step (bytes)."""
    bf16, f32 = 2, 4
    v = 0
    v += 2 * tile_rows * d_model_p * bf16          # x tile (double-buffered)
    v += 2 * d_model_p * tile_ff * bf16            # w1 tile
    v += 2 * tile_ff * d_model_p * bf16            # w2 tile
    v += 2 * (tile_ff + d_model_p) * f32           # biases
    v += tile_rows * tile_ff * (f32 + bf16)        # h1 (f32) + its bf16 copy
    v += 2 * tile_rows * d_model_p * out_bytes     # output tile
    if num_k > 1 and out_bytes != f32:
        v += tile_rows * d_model_p * f32           # f32 accumulator scratch
    return v


def _row_candidates(tile_rows_req, rows_16):
    cands = []
    for t in (tile_rows_req, 2048, 1024, 512, 256, 128, 64, 32, 16):
        t = min(t, tile_rows_req, rows_16)
        t = max((t // 16) * 16, 16)
        if t not in cands:
            cands.append(t)
    cands.sort(reverse=True)
    return cands


def _pick_ff_tile(d_ff_p, tile_ff_req):
    """Largest multiple of 128 that is <= tile_ff_req and divides d_ff_p."""
    tf = min(_round_up(max(tile_ff_req, 128), 128), d_ff_p)
    while d_ff_p % tf != 0:
        tf -= 128
    return tf


def _select_tiles(rows, d_model_p, d_ff_p, out_bytes, budget,
                  tile_rows_req, tile_ff_req, weights_resident):
    rows_16 = _round_up(rows, 16)
    cands = _row_candidates(tile_rows_req, rows_16)

    # 1) Prefer weights-resident (single k step: weights DMA'd once for the
    #    whole kernel) when it fits the VMEM budget.
    if weights_resident is not False:
        for tr in cands:
            if _vmem_estimate(tr, d_ff_p, d_model_p, 1, out_bytes) <= budget:
                return tr, d_ff_p
        if weights_resident is True:
            return cands[-1], d_ff_p  # explicit request: honour it

    # 2) d_ff-chunked reduction, sized to the budget.
    tf = _pick_ff_tile(d_ff_p, tile_ff_req)
    while True:
        for tr in cands:
            if _vmem_estimate(tr, tf, d_model_p, d_ff_p // tf, out_bytes) <= budget:
                return tr, tf
        if tf == 128:
            return cands[-1], 128
        tf = _pick_ff_tile(d_ff_p, tf - 128)


# ----------------------------------------------------------------------------
# kernels
# ----------------------------------------------------------------------------
def _ffn_kernel_resident(x_ref, w1_ref, b1_ref, w2_ref, b2_ref, o_ref):
    # Single k step: weights are whole (and VMEM-resident across row tiles).
    h1 = jnp.dot(x_ref[...], w1_ref[...], preferred_element_type=jnp.float32)
    h1 = h1 + b1_ref[...]
    # dropout(h1) == identity in eval mode.
    out = jnp.dot(h1.astype(w2_ref.dtype), w2_ref[...],
                  preferred_element_type=jnp.float32)
    o_ref[...] = (out + b2_ref[...]).astype(o_ref.dtype)


def _ffn_kernel_chunked_f32out(x_ref, w1_ref, b1_ref, w2_ref, b2_ref, o_ref):
    # d_ff-chunked reduction, accumulating directly into the f32 output block
    # (resident across the k axis) -> no separate scratch.
    k = pl.program_id(1)

    @pl.when(k == 0)
    def _():
        o_ref[...] = jnp.broadcast_to(b2_ref[...], o_ref.shape).astype(o_ref.dtype)

    h1 = jnp.dot(x_ref[...], w1_ref[...], preferred_element_type=jnp.float32)
    h1 = h1 + b1_ref[...]
    # dropout(h1) == identity in eval mode.
    o_ref[...] += jnp.dot(h1.astype(w2_ref.dtype), w2_ref[...],
                          preferred_element_type=jnp.float32)


def _ffn_kernel_chunked_acc(x_ref, w1_ref, b1_ref, w2_ref, b2_ref, o_ref, acc_ref):
    # d_ff-chunked reduction with an f32 VMEM accumulator (non-f32 output).
    k = pl.program_id(1)

    @pl.when(k == 0)
    def _():
        acc_ref[...] = jnp.zeros_like(acc_ref)

    h1 = jnp.dot(x_ref[...], w1_ref[...], preferred_element_type=jnp.float32)
    h1 = h1 + b1_ref[...]
    # dropout(h1) == identity in eval mode.
    acc_ref[...] += jnp.dot(h1.astype(w2_ref.dtype), w2_ref[...],
                            preferred_element_type=jnp.float32)

    @pl.when(k == pl.num_programs(1) - 1)
    def _():
        o_ref[...] = (acc_ref[...] + b2_ref[...]).astype(o_ref.dtype)


# ----------------------------------------------------------------------------
# wrapper
# ----------------------------------------------------------------------------
def prepare_ffn_params(w1, b1, w2, b2, *, compute_dtype=jnp.bfloat16):
    """Pad to lane-friendly sizes and cast weights once (off the hot path).

    w1: (d_model, d_ff), w2: (d_ff, d_model) — (in_features, out_features).
    """
    d_model, d_ff = w1.shape
    d_model_p = _round_up(d_model, 128)
    d_ff_p = _round_up(d_ff, 128)

    def pad2(a, r, c):
        pr, pc = r - a.shape[0], c - a.shape[1]
        return a if (pr == 0 and pc == 0) else jnp.pad(a, ((0, pr), (0, pc)))

    def pad1(a, n):
        p = n - a.shape[0]
        return a if p == 0 else jnp.pad(a, (0, p))

    return dict(
        w1=pad2(w1, d_model_p, d_ff_p).astype(compute_dtype),
        b1=pad1(b1, d_ff_p).reshape(1, d_ff_p).astype(jnp.float32),
        w2=pad2(w2, d_ff_p, d_model_p).astype(compute_dtype),
        b2=pad1(b2, d_model_p).reshape(1, d_model_p).astype(jnp.float32),
        d_model=d_model, d_ff=d_ff, d_model_p=d_model_p, d_ff_p=d_ff_p,
    )


def positionwise_feed_forward(x, params, *, tile_rows=1024, tile_ff=2048,
                              weights_resident=None, max_vmem_bytes=None):
    """x: (batch, seq, d_model); params from prepare_ffn_params."""
    batch, seq, d_model = x.shape
    assert d_model == params["d_model"]
    d_model_p, d_ff_p = params["d_model_p"], params["d_ff_p"]
    w1p, b1p, w2p, b2p = params["w1"], params["b1"], params["w2"], params["b2"]
    compute_dtype = w1p.dtype

    rows = batch * seq
    out_dtype = x.dtype
    out_bytes = jnp.dtype(out_dtype).itemsize

    physical_vmem = _physical_vmem_bytes()
    budget = int(0.70 * physical_vmem) if max_vmem_bytes is None else int(max_vmem_bytes)
    vmem_limit = int(min(0.85 * physical_vmem, physical_vmem - 4 * 1024 * 1024))

    tr, tf = _select_tiles(rows, d_model_p, d_ff_p, out_bytes, budget,
                           tile_rows, tile_ff, weights_resident)
    rows_p = _round_up(rows, tr)
    n_row_tiles = rows_p // tr
    num_k = d_ff_p // tf

    x2d = x.reshape(rows, d_model)
    if (rows_p != rows) or (d_model_p != d_model):
        x2d = jnp.pad(x2d, ((0, rows_p - rows), (0, d_model_p - d_model)))
    if x2d.dtype != compute_dtype:
        x2d = x2d.astype(compute_dtype)

    # Advisory cost estimate (helps XLA overlap surrounding cast/pad/slice ops).
    weight_bytes = (w1p.size + w2p.size) * jnp.dtype(compute_dtype).itemsize
    cost = pl.CostEstimate(
        flops=4 * rows_p * d_model_p * d_ff_p,
        transcendentals=0,
        bytes_accessed=(x2d.size * jnp.dtype(compute_dtype).itemsize
                        + rows_p * d_model_p * out_bytes
                        + weight_bytes * (1 if num_k == 1 else n_row_tiles)
                        + (b1p.size + b2p.size) * 4),
    )

    if num_k == 1:
        # Weights resident in VMEM: streamed from HBM exactly once.
        grid = (n_row_tiles,)
        in_specs = [
            pl.BlockSpec((tr, d_model_p), lambda i: (i, 0)),
            pl.BlockSpec((d_model_p, d_ff_p), lambda i: (0, 0)),
            pl.BlockSpec((1, d_ff_p), lambda i: (0, 0)),
            pl.BlockSpec((d_ff_p, d_model_p), lambda i: (0, 0)),
            pl.BlockSpec((1, d_model_p), lambda i: (0, 0)),
        ]
        out_spec = pl.BlockSpec((tr, d_model_p), lambda i: (i, 0))
        kernel = _ffn_kernel_resident
        scratch = []
        dims = ("parallel",)
    else:
        grid = (n_row_tiles, num_k)
        in_specs = [
            pl.BlockSpec((tr, d_model_p), lambda i, k: (i, 0)),
            pl.BlockSpec((d_model_p, tf), lambda i, k: (0, k)),
            pl.BlockSpec((1, tf), lambda i, k: (0, k)),
            pl.BlockSpec((tf, d_model_p), lambda i, k: (k, 0)),
            pl.BlockSpec((1, d_model_p), lambda i, k: (0, 0)),
        ]
        out_spec = pl.BlockSpec((tr, d_model_p), lambda i, k: (i, 0))
        if out_dtype == jnp.float32:
            kernel = _ffn_kernel_chunked_f32out
            scratch = []
        else:
            kernel = _ffn_kernel_chunked_acc
            scratch = [pltpu.VMEM((tr, d_model_p), jnp.float32)]
        dims = ("parallel", "arbitrary")

    out2d = pl.pallas_call(
        kernel,
        out_shape=jax.ShapeDtypeStruct((rows_p, d_model_p), out_dtype),
        grid_spec=pltpu.PrefetchScalarGridSpec(
            num_scalar_prefetch=0,
            grid=grid,
            in_specs=in_specs,
            out_specs=out_spec,
            scratch_shapes=scratch,
        ),
        compiler_params=pltpu.CompilerParams(
            dimension_semantics=dims,
            vmem_limit_bytes=vmem_limit,
        ),
        cost_estimate=cost,
    )(x2d, w1p, b1p, w2p, b2p)

    return out2d[:rows, :d_model].reshape(batch, seq, d_model)


# ----------------------------------------------------------------------------
# references & checks
# ----------------------------------------------------------------------------
def _reference_f32(x, w1, b1, w2, b2):
    h1 = jnp.einsum("bsd,df->bsf", x.astype(jnp.float32), w1) + b1
    return jnp.einsum("bsf,fd->bsd", h1, w2) + b2


def _reference_bf16(x, w1, b1, w2, b2):
    xb = x.astype(jnp.bfloat16)
    w1b = w1.astype(jnp.bfloat16)
    w2b = w2.astype(jnp.bfloat16)
    h1 = jnp.einsum("bsd,df->bsf", xb, w1b, preferred_element_type=jnp.float32) + b1
    h1b = h1.astype(jnp.bfloat16)
    return jnp.einsum("bsf,fd->bsd", h1b, w2b, preferred_element_type=jnp.float32) + b2


def _make_params(key, d_model, d_ff):
    k1, kb1, k2, kb2 = jax.random.split(key, 4)
    bound1 = 1.0 / (d_model ** 0.5)
    bound2 = 1.0 / (d_ff ** 0.5)
    w1 = jax.random.uniform(k1, (d_model, d_ff), jnp.float32, -bound1, bound1)
    b1 = jax.random.uniform(kb1, (d_ff,), jnp.float32, -bound1, bound1)
    w2 = jax.random.uniform(k2, (d_ff, d_model), jnp.float32, -bound2, bound2)
    b2 = jax.random.uniform(kb2, (d_model,), jnp.float32, -bound2, bound2)
    return w1, b1, w2, b2


def _check(key, batch, seq, d_model, d_ff, x_dtype=jnp.float32, **kw):
    kx, kp = jax.random.split(key)
    x = jax.random.normal(kx, (batch, seq, d_model), dtype=jnp.float32).astype(x_dtype)
    w1, b1, w2, b2 = _make_params(kp, d_model, d_ff)

    params = prepare_ffn_params(w1, b1, w2, b2)   # hoisted off the hot path
    out = positionwise_feed_forward(x, params, **kw)
    out = jax.block_until_ready(out)
    assert out.shape == (batch, seq, d_model)
    assert out.dtype == x.dtype
    out_f32 = out.astype(jnp.float32)

    # Tight check against a matched bf16-operand / f32-accumulate reference.
    ref_bf16 = _reference_bf16(x, w1, b1, w2, b2)
    assert jnp.allclose(out_f32, ref_bf16, atol=5e-2, rtol=5e-2)

    # Loose check against the full-f32 reference (bf16 operand rounding).
    ref_f32 = _reference_f32(x, w1, b1, w2, b2)
    assert jnp.allclose(out_f32, ref_f32, atol=8e-2, rtol=8e-2)


if __name__ == "__main__":
    key = jax.random.PRNGKey(0)
    k0, k1, k2, k3 = jax.random.split(key, 4)

    # Aligned small shape -> weights-resident single-step path.
    _check(k0, batch=2, seq=8, d_model=128, d_ff=256)
    # Unaligned shape -> exercises row / d_model / d_ff padding paths.
    _check(k1, batch=2, seq=5, d_model=96, d_ff=200)
    # Forced chunked path, f32 output -> accumulate-into-o_ref kernel,
    # grid (2 row tiles x 2 d_ff chunks).
    _check(k2, batch=4, seq=128, d_model=128, d_ff=1024,
           weights_resident=False, tile_rows=256, tile_ff=512)
    # Forced chunked path, bf16 output -> f32 scratch-accumulator kernel.
    _check(k3, batch=2, seq=128, d_model=128, d_ff=512, x_dtype=jnp.bfloat16,
           weights_resident=False, tile_rows=128, tile_ff=256)

    print("KERNEL_OK")
</pallas_src>

<mosaic_0001>
module attributes {stable_mosaic.version = 11 : i64} {
  func.func @_ffn_kernel_resident(%arg0: i32, %arg1: memref<16x128xbf16, #tpu.memory_space<vmem>>, %arg2: memref<128x256xbf16, #tpu.memory_space<vmem>>, %arg3: memref<1x256xf32, #tpu.memory_space<vmem>>, %arg4: memref<256x128xbf16, #tpu.memory_space<vmem>>, %arg5: memref<1x128xf32, #tpu.memory_space<vmem>>, %arg6: memref<16x128xf32, #tpu.memory_space<vmem>>) attributes {dimension_semantics = [#tpu.dimension_semantics<parallel>], iteration_bounds = array<i64: 1>, scalar_prefetch = 0 : i64, scratch_operands = 0 : i64, tpu.core_type = #tpu.core_type<tc>, window_params = [{transform_indices = @transform_0, window_bounds = array<i64: 16, 128>}, {pipeline_mode = #tpu.pipeline_mode<synchronous>, transform_indices = @transform_1, window_bounds = array<i64: 128, 256>}, {pipeline_mode = #tpu.pipeline_mode<synchronous>, transform_indices = @transform_2, window_bounds = array<i64: 1, 256>}, {pipeline_mode = #tpu.pipeline_mode<synchronous>, transform_indices = @transform_3, window_bounds = array<i64: 256, 128>}, {pipeline_mode = #tpu.pipeline_mode<synchronous>, transform_indices = @transform_4, window_bounds = array<i64: 1, 128>}, {transform_indices = @transform_5, window_bounds = array<i64: 16, 128>}]} {
    %c0 = arith.constant 0 : index
    %c0_0 = arith.constant 0 : index
    %0 = vector.load %arg1[%c0, %c0_0] : memref<16x128xbf16, #tpu.memory_space<vmem>>, vector<16x128xbf16>
    %c0_1 = arith.constant 0 : index
    %c0_2 = arith.constant 0 : index
    %1 = vector.load %arg2[%c0_1, %c0_2] : memref<128x256xbf16, #tpu.memory_space<vmem>>, vector<128x256xbf16>
    %cst = arith.constant dense<0.000000e+00> : vector<16x256xf32>
    %2 = tpu.matmul %0, %1, %cst {dimension_numbers = #tpu.dot_dimension_numbers<[1], [0], [0], [1], [0, 0, 1, 1], [], []>} : vector<16x128xbf16>, vector<128x256xbf16>, vector<16x256xf32> -> vector<16x256xf32>
    %c0_3 = arith.constant 0 : index
    %c0_4 = arith.constant 0 : index
    %3 = vector.load %arg3[%c0_3, %c0_4] : memref<1x256xf32, #tpu.memory_space<vmem>>, vector<1x256xf32>
    %4 = vector.broadcast %3 : vector<1x256xf32> to vector<16x256xf32>
    %5 = arith.addf %2, %4 : vector<16x256xf32>
    %6 = arith.truncf %5 : vector<16x256xf32> to vector<16x256xbf16>
    %c0_5 = arith.constant 0 : index
    %c0_6 = arith.constant 0 : index
    %7 = vector.load %arg4[%c0_5, %c0_6] : memref<256x128xbf16, #tpu.memory_space<vmem>>, vector<256x128xbf16>
    %cst_7 = arith.constant dense<0.000000e+00> : vector<16x128xf32>
    %8 = tpu.matmul %6, %7, %cst_7 {dimension_numbers = #tpu.dot_dimension_numbers<[1], [0], [0], [1], [0, 0, 1, 1], [], []>} : vector<16x256xbf16>, vector<256x128xbf16>, vector<16x128xf32> -> vector<16x128xf32>
    %c0_8 = arith.constant 0 : index
    %c0_9 = arith.constant 0 : index
    %9 = vector.load %arg5[%c0_8, %c0_9] : memref<1x128xf32, #tpu.memory_space<vmem>>, vector<1x128xf32>
    %10 = vector.broadcast %9 : vector<1x128xf32> to vector<16x128xf32>
    %11 = arith.addf %8, %10 : vector<16x128xf32>
    %c0_10 = arith.constant 0 : index
    %c0_11 = arith.constant 0 : index
    %12 = vector.load %arg6[%c0_10, %c0_11] : memref<16x128xf32, #tpu.memory_space<vmem>>, vector<16x128xf32>
    tpu.vector_store %arg6[%c0_10, %c0_11], %11 {strides = array<i32>} : memref<16x128xf32, #tpu.memory_space<vmem>>, vector<16x128xf32>,
    return
  }
  func.func @transform_0(%arg0: i32) -> (i32, i32) {
    %c0_i32 = arith.constant 0 : i32
    %c0_i32_0 = arith.constant 0 : i32
    return %arg0, %c0_i32 : i32, i32
  }
  func.func @transform_1(%arg0: i32) -> (i32, i32) {
    %c0_i32 = arith.constant 0 : i32
    %c0_i32_0 = arith.constant 0 : i32
    %c0_i32_1 = arith.constant 0 : i32
    return %c0_i32, %c0_i32_0 : i32, i32
  }
  func.func @transform_2(%arg0: i32) -> (i32, i32) {
    %c0_i32 = arith.constant 0 : i32
    %c0_i32_0 = arith.constant 0 : i32
    %c0_i32_1 = arith.constant 0 : i32
    return %c0_i32, %c0_i32_0 : i32, i32
  }
  func.func @transform_3(%arg0: i32) -> (i32, i32) {
    %c0_i32 = arith.constant 0 : i32
    %c0_i32_0 = arith.constant 0 : i32
    %c0_i32_1 = arith.constant 0 : i32
    return %c0_i32, %c0_i32_0 : i32, i32
  }
  func.func @transform_4(%arg0: i32) -> (i32, i32) {
    %c0_i32 = arith.constant 0 : i32
    %c0_i32_0 = arith.constant 0 : i32
    %c0_i32_1 = arith.constant 0 : i32
    return %c0_i32, %c0_i32_0 : i32, i32
  }
  func.func @transform_5(%arg0: i32) -> (i32, i32) {
    %c0_i32 = arith.constant 0 : i32
    %c0_i32_0 = arith.constant 0 : i32
    return %arg0, %c0_i32 : i32, i32
  }
}

</mosaic_0001>

<llo_original>
// kernel: tpu_custom_call.1
$region0: #{tpu_custom_call.1}
  #allocation0 [shape = 'u32[]', space=smem, size = 0x4, offset = 0x4, fixed_abs, tag = 'smem constant byte address 0x4 - core index']
  #allocation1 [shape = 'u32[144,128]{1,0:T(1,128)}', space=vmem, size = 0x12000, scoped, tag = 'internal scratch']
  %s0 = inlined_call_operand.hbm [shape: bf16[16,128], index: 0, kind: input, shape index: {}]
  %s1 = inlined_call_operand.hbm [shape: bf16[128,256], index: 1, kind: input, shape index: {}]
  %s2 = inlined_call_operand.vmem [shape: f32[1,256], index: 2, kind: input, shape index: {}]
  %s3 = inlined_call_operand.hbm [shape: bf16[256,128], index: 3, kind: input, shape index: {}]
  %s4 = inlined_call_operand.vmem [shape: f32[1,128], index: 4, kind: input, shape index: {}]
  %s5 = inlined_call_operand.hbm [shape: f32[16,128], index: 5, kind: output, shape index: {}]
  %s6 = sld [smem:[#allocation0]]
  $region42: #{tpu_custom_call.1} parent=0
    _
  %s8 = ssub.s32 1, %s6
  %s9 = scalar_select 0, %s8, %s6
  $region1: #{tpu_custom_call.1} parent=0
    #allocation2 [shape = 'u8[4096]{0}', space=vmem, size = 0x1000, scoped, tag = 'input window, operand 0, single buffered']
    #allocation3 [shape = 's32[1]{0}', space=sflag, size = 0x4, scoped, tag = 'scoped memory for tpu_custom_call.1']
    #allocation4 [shape = 's32[1]{0}', space=sflag, size = 0x4, scoped, tag = 'scoped memory for tpu_custom_call.1']
    #allocation5 [shape = 'u8[65536]{0}', space=vmem, size = 0x10000, scoped, tag = 'input window, operand 1, single buffered']
    #allocation6 [shape = 's32[1]{0}', space=sflag, size = 0x4, scoped, tag = 'scoped memory for tpu_custom_call.1']
    #allocation7 [shape = 'u8[65536]{0}', space=vmem, size = 0x10000, scoped, tag = 'input window, operand 3, single buffered']
    #allocation8 [shape = 'u8[8192]{0}', space=vmem, size = 0x2000, scoped, tag = 'output window, operand 0, single buffered']
    %10 = vsyncpa [#allocation3], 0
    %11 = vsyncpa [#allocation6], 0
    %12 = vsyncpa [#allocation4], 0
    // Predicated region
    $region2: #{tpu_custom_call.1} parent=1 // pred_check
      _
    $region3: #{tpu_custom_call.1} parent=1 // pred_check_branch
      %14 = sbr.rel (0) target = $region5
    $region4: #{tpu_custom_call.1} parent=1 // pred_region
      %s16 = ssub.s32 128, 128
      %17 = vsyncadd [#allocation3], %s16
      %s18 = sshll.u32 [#allocation2], 4
      %s19 = int_to_ptr.vmem [resolvable:$true] %s18
      %24 = dma.hbm_to_vmem [thread:$0]  %s0, 128, %s19, [#allocation3], 64, 64, 4
    $region5: #{tpu_custom_call.1} parent=1 // pred_fallthru
      _
    // Predicated region
    $region6: #{tpu_custom_call.1} parent=1 // pred_check
      _
    $region7: #{tpu_custom_call.1} parent=1 // pred_check_branch
      %26 = sbr.rel (0) target = $region9
    $region8: #{tpu_custom_call.1} parent=1 // pred_region
      %s28 = ssub.s32 2048, 2048
      %29 = vsyncadd [#allocation6], %s28
      %s30 = sshll.u32 [#allocation5], 4
      %s31 = int_to_ptr.vmem [resolvable:$true] %s30
      %36 = dma.hbm_to_vmem [thread:$0]  %s1, 2048, %s31, [#allocation6], 128, 128, 8
    $region9: #{tpu_custom_call.1} parent=1 // pred_fallthru
      _
    // Predicated region
    $region10: #{tpu_custom_call.1} parent=1 // pred_check
      _
    $region11: #{tpu_custom_call.1} parent=1 // pred_check_branch
      %38 = sbr.rel (0) target = $region13
    $region12: #{tpu_custom_call.1} parent=1 // pred_region
      _
    $region13: #{tpu_custom_call.1} parent=1 // pred_fallthru
      _
    // Predicated region
    $region14: #{tpu_custom_call.1} parent=1 // pred_check
      _
    $region15: #{tpu_custom_call.1} parent=1 // pred_check_branch
      %40 = sbr.rel (0) target = $region17
    $region16: #{tpu_custom_call.1} parent=1 // pred_region
      %s42 = ssub.s32 2048, 2048
      %43 = vsyncadd [#allocation6], %s42
      %s44 = sshll.u32 [#allocation7], 4
      %s45 = int_to_ptr.vmem [resolvable:$true] %s44
      %50 = dma.hbm_to_vmem [thread:$0]  %s3, 2048, %s45, [#allocation6], 64, 64, 4
    $region17: #{tpu_custom_call.1} parent=1 // pred_fallthru
      _
    // Predicated region
    $region18: #{tpu_custom_call.1} parent=1 // pred_check
      _
    $region19: #{tpu_custom_call.1} parent=1 // pred_check_branch
      %52 = sbr.rel (0) target = $region21
    $region20: #{tpu_custom_call.1} parent=1 // pred_region
      _
    $region21: #{tpu_custom_call.1} parent=1 // pred_fallthru
      _
    // Predicated region
    $region22: #{tpu_custom_call.1} parent=1 // pred_check
      _
    $region23: #{tpu_custom_call.1} parent=1 // pred_check_branch
      %54 = sbr.rel (0) target = $region25
    $region24: #{tpu_custom_call.1} parent=1 // pred_region
      %55 = dma.done [#allocation3], 128
    $region25: #{tpu_custom_call.1} parent=1 // pred_fallthru
      _
    // Predicated region
    $region26: #{tpu_custom_call.1} parent=1 // pred_check
      _
    $region27: #{tpu_custom_call.1} parent=1 // pred_check_branch
      %57 = sbr.rel (0) target = $region29
    $region28: #{tpu_custom_call.1} parent=1 // pred_region
      %58 = dma.done [#allocation6], 2048
    $region29: #{tpu_custom_call.1} parent=1 // pred_fallthru
      _
    // Predicated region
    $region30: #{tpu_custom_call.1} parent=1 // pred_check
      _
    $region31: #{tpu_custom_call.1} parent=1 // pred_check_branch
      %60 = sbr.rel (0) target = $region33
    $region32: #{tpu_custom_call.1} parent=1 // pred_region
      %61 = dma.done [#allocation6], 2048
    $region33: #{tpu_custom_call.1} parent=1 // pred_fallthru
      _
    %v63 = vld [vmem:[#allocation2] sm:$0xf]
    %v64 = vld [vmem:[#allocation2 + $0x4] sm:$0xf]
    %v65 = vld [vmem:[#allocation5] sm:$0xff]
    %v66 = vld [vmem:[#allocation5 + $0x8] sm:$0xff]
    %v67 = vld [vmem:[#allocation5 + $0x10] sm:$0xff]
    %v68 = vld [vmem:[#allocation5 + $0x18] sm:$0xff]
    %v69 = vld [vmem:[#allocation5 + $0x20] sm:$0xff]
    %v70 = vld [vmem:[#allocation5 + $0x28] sm:$0xff]
    %v71 = vld [vmem:[#allocation5 + $0x30] sm:$0xff]
    %v72 = vld [vmem:[#allocation5 + $0x38] sm:$0xff]
    %v73 = vld [vmem:[#allocation5 + $0x40] sm:$0xff]
    %v74 = vld [vmem:[#allocation5 + $0x48] sm:$0xff]
    %v75 = vld [vmem:[#allocation5 + $0x50] sm:$0xff]
    %v76 = vld [vmem:[#allocation5 + $0x58] sm:$0xff]
    %v77 = vld [vmem:[#allocation5 + $0x60] sm:$0xff]
    %v78 = vld [vmem:[#allocation5 + $0x68] sm:$0xff]
    %v79 = vld [vmem:[#allocation5 + $0x70] sm:$0xff]
    %v80 = vld [vmem:[#allocation5 + $0x78] sm:$0xff]
    %v81 = vld [vmem:[%s2] sm:$0x3]
    %v83 = vlaneseq
    %v84 = vshrl.u32 %v83, 7
    %v85 = vsub.s32 0, %v84
    %v86 = vrot.slane %v81, %v85
    %v87 = vlaneseq
    %v88 = vshrl.u32 %v87, 7
    %v89 = vsub.s32 1, %v88
    %v90 = vrot.slane %v81, %v89
    %v95 = vunpack.c.l.b16 %v63
    %v96 = vunpack.c.l.b16 %v64
    %v97 = vpack.c.b16 %v96, %v95
    %v115 = vunpack.c.l.b16 %v65
    %v116 = vunpack.c.h.b16 %v65
    %v117 = vunpack.c.l.b16 %v66
    %v118 = vunpack.c.h.b16 %v66
    %v119 = vunpack.c.l.b16 %v67
    %v120 = vunpack.c.h.b16 %v67
    %v121 = vunpack.c.l.b16 %v68
    %v122 = vunpack.c.h.b16 %v68
    %v123 = vunpack.c.l.b16 %v69
    %v124 = vunpack.c.h.b16 %v69
    %v125 = vunpack.c.l.b16 %v70
    %v126 = vunpack.c.h.b16 %v70
    %v127 = vunpack.c.l.b16 %v71
    %v128 = vunpack.c.h.b16 %v71
    %v129 = vunpack.c.l.b16 %v72
    %v130 = vunpack.c.h.b16 %v72
    %v131 = vunpack.c.l.b16 %v73
    %v132 = vunpack.c.h.b16 %v73
    %v133 = vunpack.c.l.b16 %v74
    %v134 = vunpack.c.h.b16 %v74
    %v135 = vunpack.c.l.b16 %v75
    %v136 = vunpack.c.h.b16 %v75
    %v137 = vunpack.c.l.b16 %v76
    %v138 = vunpack.c.h.b16 %v76
    %v139 = vunpack.c.l.b16 %v77
    %v140 = vunpack.c.h.b16 %v77
    %v141 = vunpack.c.l.b16 %v78
    %v142 = vunpack.c.h.b16 %v78
    %v143 = vunpack.c.l.b16 %v79
    %v144 = vunpack.c.h.b16 %v79
    %v145 = vunpack.c.l.b16 %v80
    %v146 = vunpack.c.h.b16 %v80
    %v147 = vpack.c.b16 %v117, %v115
    %v148 = vpack.c.b16 %v118, %v116
    %v149 = vpack.c.b16 %v121, %v119
    %v150 = vpack.c.b16 %v122, %v120
    %v151 = vpack.c.b16 %v125, %v123
    %v152 = vpack.c.b16 %v126, %v124
    %v153 = vpack.c.b16 %v129, %v127
    %v154 = vpack.c.b16 %v130, %v128
    %v155 = vpack.c.b16 %v133, %v131
    %v156 = vpack.c.b16 %v134, %v132
    %v157 = vpack.c.b16 %v137, %v135
    %v158 = vpack.c.b16 %v138, %v136
    %v159 = vpack.c.b16 %v141, %v139
    %v160 = vpack.c.b16 %v142, %v140
    %v161 = vpack.c.b16 %v145, %v143
    %v162 = vpack.c.b16 %v146, %v144
    %179 = vmatprep.subr.bf16.mxu0 %v148
    %180 = vmatpush1.bf16.msra.mxu0 %v147
    %181 = vmatprep.subr.bf16.mxu0 %v150
    %182 = vmatpush1.bf16.msra.mxu0 %v149
    %183 = vmatprep.subr.bf16.mxu0 %v152
    %184 = vmatpush1.bf16.msra.mxu0 %v151
    %185 = vmatprep.subr.bf16.mxu0 %v154
    %186 = vmatpush1.bf16.msra.mxu0 %v153
    %187 = vmatprep.subr.bf16.mxu0 %v156
    %188 = vmatpush1.bf16.msra.mxu0 %v155
    %189 = vmatprep.subr.bf16.mxu0 %v158
    %190 = vmatpush1.bf16.msra.mxu0 %v157
    %191 = vmatprep.subr.bf16.mxu0 %v160
    %192 = vmatpush1.bf16.msra.mxu0 %v159
    %193 = vmatprep.subr.bf16.mxu0 %v162
    %194 = vmatpush1.bf16.msra.mxu0 %v161
    %195 = vmatprep.subr.bf16.mxu0 0
    %196 = vmatpush1.bf16.msra.mxu0 0
    %197 = vmatprep.subr.bf16.mxu0 0
    %198 = vmatpush1.bf16.msra.mxu0 0
    %199 = vmatprep.subr.bf16.mxu0 0
    %200 = vmatpush1.bf16.msra.mxu0 0
    %201 = vmatprep.subr.bf16.mxu0 0
    %202 = vmatpush1.bf16.msra.mxu0 0
    %203 = vmatprep.subr.bf16.mxu0 0
    %204 = vmatpush1.bf16.msra.mxu0 0
    %205 = vmatprep.subr.bf16.mxu0 0
    %206 = vmatpush1.bf16.msra.mxu0 0
    %207 = vmatprep.subr.bf16.mxu0 0
    %208 = vmatpush1.bf16.msra.mxu0 0
    %209 = vmatprep.subr.bf16.mxu0 0
    %210 = vmatpush1.bf16.msra.mxu0 0
    %211 = vmatprep.mubr.bf16.mxu0 0
    %212 = vmatmul.mubr.bf16.gmra.mrb[0].mxu0 %v97
    %v213 = vpop.f32.mrb[0].mxu0
    %v214 = vadd.f32 %v86, %v213
    %v215 = vpop.f32.mrb[0].mxu0
    %v216 = vadd.f32 %v90, %v215
    %v217 = vpop.f32.mrb[0].mxu0
    %v218 = vadd.f32 %v86, %v217
    %v219 = vpop.f32.mrb[0].mxu0
    %v220 = vadd.f32 %v90, %v219
    %221 = vdwg.mxu0
    %v222 = vpack.c.bf16 %v218, %v214
    %v223 = vpack.c.bf16 %v220, %v216
    %v224 = vld [vmem:[#allocation7] sm:$0xf]
    %v225 = vld [vmem:[#allocation7 + $0x4] sm:$0xf]
    %v226 = vld [vmem:[#allocation7 + $0x8] sm:$0xf]
    %v227 = vld [vmem:[#allocation7 + $0xc] sm:$0xf]
    %v228 = vld [vmem:[#allocation7 + $0x10] sm:$0xf]
    %v229 = vld [vmem:[#allocation7 + $0x14] sm:$0xf]
    %v230 = vld [vmem:[#allocation7 + $0x18] sm:$0xf]
    %v231 = vld [vmem:[#allocation7 + $0x1c] sm:$0xf]
    %v232 = vld [vmem:[#allocation7 + $0x20] sm:$0xf]
    %v233 = vld [vmem:[#allocation7 + $0x24] sm:$0xf]
    %v234 = vld [vmem:[#allocation7 + $0x28] sm:$0xf]
    %v235 = vld [vmem:[#allocation7 + $0x2c] sm:$0xf]
    %v236 = vld [vmem:[#allocation7 + $0x30] sm:$0xf]
    %v237 = vld [vmem:[#allocation7 + $0x34] sm:$0xf]
    %v238 = vld [vmem:[#allocation7 + $0x38] sm:$0xf]
    %v239 = vld [vmem:[#allocation7 + $0x3c] sm:$0xf]
    %v240 = vld [vmem:[#allocation7 + $0x40] sm:$0xf]
    %v241 = vld [vmem:[#allocation7 + $0x44] sm:$0xf]
    %v242 = vld [vmem:[#allocation7 + $0x48] sm:$0xf]
    %v243 = vld [vmem:[#allocation7 + $0x4c] sm:$0xf]
    %v244 = vld [vmem:[#allocation7 + $0x50] sm:$0xf]
    %v245 = vld [vmem:[#allocation7 + $0x54] sm:$0xf]
    %v246 = vld [vmem:[#allocation7 + $0x58] sm:$0xf]
    %v247 = vld [vmem:[#allocation7 + $0x5c] sm:$0xf]
    %v248 = vld [vmem:[#allocation7 + $0x60] sm:$0xf]
    %v249 = vld [vmem:[#allocation7 + $0x64] sm:$0xf]
    %v250 = vld [vmem:[#allocation7 + $0x68] sm:$0xf]
    %v251 = vld [vmem:[#allocation7 + $0x6c] sm:$0xf]
    %v252 = vld [vmem:[#allocation7 + $0x70] sm:$0xf]
    %v253 = vld [vmem:[#allocation7 + $0x74] sm:$0xf]
    %v254 = vld [vmem:[#allocation7 + $0x78] sm:$0xf]
    %v255 = vld [vmem:[#allocation7 + $0x7c] sm:$0xf]
    %v256 = vld [vmem:[%s4] sm:$0x1]
    %v258 = vlaneseq
    %v259 = vshrl.u32 %v258, 7
    %v260 = vsub.s32 0, %v259
    %v261 = vrot.slane %v256, %v260
    %v295 = vunpack.c.l.b16 %v224
    %v296 = vunpack.c.l.b16 %v225
    %v297 = vunpack.c.l.b16 %v226
    %v298 = vunpack.c.l.b16 %v227
    %v299 = vunpack.c.l.b16 %v228
    %v300 = vunpack.c.l.b16 %v229
    %v301 = vunpack.c.l.b16 %v230
    %v302 = vunpack.c.l.b16 %v231
    %v303 = vunpack.c.l.b16 %v232
    %v304 = vunpack.c.l.b16 %v233
    %v305 = vunpack.c.l.b16 %v234
    %v306 = vunpack.c.l.b16 %v235
    %v307 = vunpack.c.l.b16 %v236
    %v308 = vunpack.c.l.b16 %v237
    %v309 = vunpack.c.l.b16 %v238
    %v310 = vunpack.c.l.b16 %v239
    %v311 = vunpack.c.l.b16 %v240
    %v312 = vunpack.c.l.b16 %v241
    %v313 = vunpack.c.l.b16 %v242
    %v314 = vunpack.c.l.b16 %v243
    %v315 = vunpack.c.l.b16 %v244
    %v316 = vunpack.c.l.b16 %v245
    %v317 = vunpack.c.l.b16 %v246
    %v318 = vunpack.c.l.b16 %v247
    %v319 = vunpack.c.l.b16 %v248
    %v320 = vunpack.c.l.b16 %v249
    %v321 = vunpack.c.l.b16 %v250
    %v322 = vunpack.c.l.b16 %v251
    %v323 = vunpack.c.l.b16 %v252
    %v324 = vunpack.c.l.b16 %v253
    %v325 = vunpack.c.l.b16 %v254
    %v326 = vunpack.c.l.b16 %v255
    %v327 = vpack.c.b16 %v296, %v295
    %v328 = vpack.c.b16 %v298, %v297
    %v329 = vpack.c.b16 %v300, %v299
    %v330 = vpack.c.b16 %v302, %v301
    %v331 = vpack.c.b16 %v304, %v303
    %v332 = vpack.c.b16 %v306, %v305
    %v333 = vpack.c.b16 %v308, %v307
    %v334 = vpack.c.b16 %v310, %v309
    %v335 = vpack.c.b16 %v312, %v311
    %v336 = vpack.c.b16 %v314, %v313
    %v337 = vpack.c.b16 %v316, %v315
    %v338 = vpack.c.b16 %v318, %v317
    %v339 = vpack.c.b16 %v320, %v319
    %v340 = vpack.c.b16 %v322, %v321
    %v341 = vpack.c.b16 %v324, %v323
    %v342 = vpack.c.b16 %v326, %v325
    %359 = vmatprep.subr.bf16.mxu0 0
    %360 = vmatpush1.bf16.msra.mxu0 %v327
    %361 = vmatprep.subr.bf16.mxu0 0
    %362 = vmatpush1.bf16.msra.mxu0 %v328
    %363 = vmatprep.subr.bf16.mxu0 0
    %364 = vmatpush1.bf16.msra.mxu0 %v329
    %365 = vmatprep.subr.bf16.mxu0 0
    %366 = vmatpush1.bf16.msra.mxu0 %v330
    %367 = vmatprep.subr.bf16.mxu0 0
    %368 = vmatpush1.bf16.msra.mxu0 %v331
    %369 = vmatprep.subr.bf16.mxu0 0
    %370 = vmatpush1.bf16.msra.mxu0 %v332
    %371 = vmatprep.subr.bf16.mxu0 0
    %372 = vmatpush1.bf16.msra.mxu0 %v333
    %373 = vmatprep.subr.bf16.mxu0 0
    %374 = vmatpush1.bf16.msra.mxu0 %v334
    %375 = vmatprep.subr.bf16.mxu0 0
    %376 = vmatpush1.bf16.msra.mxu0 %v335
    %377 = vmatprep.subr.bf16.mxu0 0
    %378 = vmatpush1.bf16.msra.mxu0 %v336
    %379 = vmatprep.subr.bf16.mxu0 0
    %380 = vmatpush1.bf16.msra.mxu0 %v337
    %381 = vmatprep.subr.bf16.mxu0 0
    %382 = vmatpush1.bf16.msra.mxu0 %v338
    %383 = vmatprep.subr.bf16.mxu0 0
    %384 = vmatpush1.bf16.msra.mxu0 %v339
    %385 = vmatprep.subr.bf16.mxu0 0
    %386 = vmatpush1.bf16.msra.mxu0 %v340
    %387 = vmatprep.subr.bf16.mxu0 0
    %388 = vmatpush1.bf16.msra.mxu0 %v341
    %389 = vmatprep.subr.bf16.mxu0 0
    %390 = vmatpush1.bf16.msra.mxu0 %v342
    %391 = vmatprep.mubr.bf16.mxu0 %v223
    %392 = vmatmul.mubr.bf16.gmra.mrb[0].mxu0 %v222
    %v393 = vpop.f32.mrb[0].mxu0
    %v394 = vadd.f32 %v261, %v393
    %v395 = vpop.f32.mrb[0].mxu0
    %v396 = vpop.f32.mrb[0].mxu0
    %v397 = vadd.f32 %v261, %v396
    %v398 = vpop.f32.mrb[0].mxu0
    %399 = vdwg.mxu0
    %400 = vst [vmem:[#allocation8] sm:$0xff] %v394
    %401 = vst [vmem:[#allocation8 + $0x8] sm:$0xff] %v397
    // Predicated region
    $region34: #{tpu_custom_call.1} parent=1 // pred_check
      _
    $region35: #{tpu_custom_call.1} parent=1 // pred_check_branch
      %403 = sbr.rel (0) target = $region37
    $region36: #{tpu_custom_call.1} parent=1 // pred_region
      %s405 = ssub.s32 256, 256
      %406 = vsyncadd [#allocation4], %s405
      %s407 = sshll.u32 [#allocation8], 4
      %s408 = int_to_ptr.vmem [resolvable:$true] %s407
      %413 = dma.vmem_to_hbm [thread:$0]  %s408, 256, %s5, [#allocation4], 128, 128, 8
    $region37: #{tpu_custom_call.1} parent=1 // pred_fallthru
      _
    // Predicated region
    $region38: #{tpu_custom_call.1} parent=1 // pred_check
      _
    $region39: #{tpu_custom_call.1} parent=1 // pred_check_branch
      %415 = sbr.rel (0) target = $region41
    $region40: #{tpu_custom_call.1} parent=1 // pred_region
      %416 = dma.done [#allocation4], 256
    $region41: #{tpu_custom_call.1} parent=1 // pred_fallthru
      _
    %417 = vsyncpa [#allocation3], 1
    %418 = vsyncpa [#allocation6], 1
    %419 = vsyncpa [#allocation4], 1

</llo_original>
